<compile_context>
chip_gen: v7x
topology: tpu7x:2x2x1
jax: 0.10.0
libtpu: 0.0.40
codegen_flags: <defaults>
</compile_context>

<pallas_src>
import functools
import random as pyrandom

import numpy as np
import jax
import jax.numpy as jnp
from jax.experimental import pallas as pl
from jax.experimental.pallas import tpu as pltpu

# ----------------------------- body-part tables -----------------------------
left_hand = [i - 1 for i in [9, 10, 11, 12, 24, 25]]
left_leg = [i - 1 for i in [17, 18, 19, 20]]
right_hand = [i - 1 for i in [5, 6, 7, 8, 22, 23]]
right_leg = [i - 1 for i in [13, 14, 15, 16]]
trunk = [i - 1 for i in [4, 3, 21, 2, 1]]
body_parts = [trunk, left_hand, right_hand, left_leg, right_leg]


# ------------------------------ Pallas kernels ------------------------------
def _mlp_norm_kernel(x_ref, w0_ref, b0_ref, w1_ref, b1_ref, w2_ref, b2_ref,
                     o_ref, *, seg):
    """Encoder body (Linear+ReLU) -> MoCo MLP head (Linear -> BatchNorm1d
    (per-segment batch stats, identity affine) -> ReLU -> Linear) -> fused L2
    normalization epilogue.  Weights & x arrive pre-cast to bf16; MXU
    accumulates in f32; BN / normalize math is f32."""
    x = x_ref[...]                                            # bf16 (rows_blk, d_in_pad)
    h = jnp.dot(x, w0_ref[...], preferred_element_type=jnp.float32) + b0_ref[...]
    h = jnp.maximum(h, 0.0)
    z = jnp.dot(h.astype(jnp.bfloat16), w1_ref[...],
                preferred_element_type=jnp.float32) + b1_ref[...]
    rows, dim = z.shape
    num_seg = rows // seg
    if num_seg == 1:
        mu = jnp.mean(z, axis=0, keepdims=True)
        var = jnp.mean(jnp.square(z - mu), axis=0, keepdims=True)
        z = (z - mu) * jax.lax.rsqrt(var + 1e-5)
    else:
        # reshape form: no in-kernel concat, keeps (8,128) layout, no extra stores
        z3 = z.reshape(num_seg, seg, dim)
        mu = jnp.mean(z3, axis=1, keepdims=True)
        var = jnp.mean(jnp.square(z3 - mu), axis=1, keepdims=True)
        z = ((z3 - mu) * jax.lax.rsqrt(var + 1e-5)).reshape(rows, dim)
    z = jnp.maximum(z, 0.0)
    y = jnp.dot(z.astype(jnp.bfloat16), w2_ref[...],
                preferred_element_type=jnp.float32) + b2_ref[...]
    # fused F.normalize(dim=1): rsqrt goes to the EUP slot (free under the MXU)
    ssq = jnp.sum(y * y, axis=-1, keepdims=True)
    o_ref[...] = y * jax.lax.rsqrt(jnp.maximum(ssq, 1e-24))


def _pick_row_block(rows, seg):
    """Row block = whole BN segments; prefer the largest block <= 512 rows that
    still leaves >= 2 grid steps (megacore split + pipelining)."""
    num_seg = rows // seg
    divisors = [d for d in range(1, num_seg + 1) if num_seg % d == 0]
    cands = [d for d in divisors if d * seg <= 512 and num_seg // d >= 2]
    if cands:
        return max(cands) * seg
    small = [d for d in divisors if d * seg <= 512]
    return (max(small) if small else num_seg) * seg


def mlp_encode_normalize(kparams, feat, seg):
    """One row-tiled kernel call for a stacked feature matrix.
    TODO(synk): the real base encoder is an external ST-GCN loaded via
    import_class(); this Linear+ReLU stand-in keeps the same output contract."""
    rows, d_in = feat.shape
    assert rows % seg == 0 and seg % 8 == 0
    f_dim = kparams["w2"].shape[1]
    row_blk = _pick_row_block(rows, seg)
    nb = rows // row_blk
    feat = feat.astype(jnp.bfloat16)                      # one cast in the wrapper
    args = (feat, kparams["w0"], kparams["b0"], kparams["w1"], kparams["b1"],
            kparams["w2"], kparams["b2"])
    in_specs = [pl.BlockSpec((row_blk, d_in), lambda i: (i, 0))]
    # weights/biases: same block index every step -> stay resident in VMEM
    in_specs += [pl.BlockSpec(a.shape, lambda i: (0, 0)) for a in args[1:]]
    kernel = functools.partial(_mlp_norm_kernel, seg=seg)
    return pl.pallas_call(
        kernel,
        grid=(nb,),
        in_specs=in_specs,
        out_specs=pl.BlockSpec((row_blk, f_dim), lambda i: (i, 0)),
        out_shape=jax.ShapeDtypeStruct((rows, f_dim), jnp.float32),
        compiler_params=pltpu.CompilerParams(dimension_semantics=("parallel",)),
    )(*args)


def _neg_logits_kernel(lhs_ref, queue_ref, o_ref, *, inv_t):
    # both operands arrive pre-cast to bf16; lane-dense 128-aligned output block
    o_ref[...] = jnp.dot(lhs_ref[...], queue_ref[...],
                         preferred_element_type=jnp.float32) * inv_t


def _pick_queue_tile(k):
    # largest 128-multiple tile that keeps >= 2 grid blocks (megacore + pipeline)
    for cand in (512, 256, 128):
        if k % cand == 0 and k // cand >= 2:
            return cand
    return k


def queue_logits(lhs, queue, temperature):
    """[stackedN, K] = (stacked q/p/c) @ queue, K-tiled and megacore-parallel.
    The queue is never fully resident in VMEM (v7x has 64 MiB)."""
    lhs = lhs.astype(jnp.bfloat16)                        # one cast in the wrapper
    rows, c = lhs.shape
    kq = queue.shape[1]
    tk = _pick_queue_tile(kq)
    kernel = functools.partial(_neg_logits_kernel, inv_t=1.0 / temperature)
    return pl.pallas_call(
        kernel,
        grid=(kq // tk,),
        in_specs=[pl.BlockSpec((rows, c), lambda j: (0, 0)),
                  pl.BlockSpec((c, tk), lambda j: (0, j))],
        out_specs=pl.BlockSpec((rows, tk), lambda j: (0, j)),
        out_shape=jax.ShapeDtypeStruct((rows, kq), jnp.float32),
        compiler_params=pltpu.CompilerParams(dimension_semantics=("parallel",)),
    )(lhs, queue)


# ------------------------------ glue (plain JAX) -----------------------------
def init_encoder_params(key, d_in, dim_mlp, feature_dim):
    k0, k1, k2 = jax.random.split(key, 3)

    def lin(k, fan_in, fan_out):
        bound = 1.0 / np.sqrt(fan_in)
        kw, kb = jax.random.split(k)
        w = jax.random.uniform(kw, (fan_in, fan_out), jnp.float32, -bound, bound)
        b = jax.random.uniform(kb, (1, fan_out), jnp.float32, -bound, bound)
        return w, b

    w0, b0 = lin(k0, d_in, dim_mlp)
    w1, b1 = lin(k1, dim_mlp, dim_mlp)
    w2, b2 = lin(k2, dim_mlp, feature_dim)
    return dict(w0=w0, b0=b0, w1=w1, b1=b1, w2=w2, b2=b2)


def prep_kernel_params(params, d_in_pad):
    """Pad w0's input dim to a 128 multiple and pre-cast weights to bf16 once
    per call (biases stay f32; they add onto the f32 accumulator)."""
    w0 = params["w0"]
    d_in = w0.shape[0]
    if d_in < d_in_pad:
        w0 = jnp.pad(w0, ((0, d_in_pad - d_in), (0, 0)))
    return dict(w0=w0.astype(jnp.bfloat16), b0=params["b0"],
                w1=params["w1"].astype(jnp.bfloat16), b1=params["b1"],
                w2=params["w2"].astype(jnp.bfloat16), b2=params["b2"])


def _pad_cols(x, to):
    d = x.shape[1]
    return x if d == to else jnp.pad(x, ((0, 0), (0, to - d)))


def pooled_features(x, mask=None):
    # TODO(synk): the real base encoder is an external ST-GCN loaded via
    # import_class(); this deterministic pooling stand-in keeps the same
    # (p, c) output contract when a mask is given.
    n, c, t, v, m = x.shape
    if mask is None:
        return x.mean(axis=(2, 4)).reshape(n, c * v)
    w = jnp.repeat(mask.astype(x.dtype), 4, axis=0)            # [T, V]
    wb = w[None, None, :, :, None]
    den_p = jnp.maximum(w.sum(axis=0) * m, 1.0)[None, None, :]
    den_c = jnp.maximum((1.0 - w).sum(axis=0) * m, 1.0)[None, None, :]
    feat_p = ((x * wb).sum(axis=(2, 4)) / den_p).reshape(n, c * v)
    feat_c = ((x * (1.0 - wb)).sum(axis=(2, 4)) / den_c).reshape(n, c * v)
    return feat_p, feat_c


def ske_swap(x, rng, *, spa_l=1, spa_u=4, tem_l=1, tem_u=15,
             swap_mode="swap", spatial_mode="semantic"):
    """Random choices on host (tiny scalars only); swap + mask built on device,
    so the skeleton tensor never leaves HBM."""
    n_batch, c, t, v, m = x.shape
    ds = 4
    n_shift = rng.randint(1, n_batch - 2)          # torch.randint(1, N-1) -> [1, N-2]
    if spatial_mode == "semantic":
        cs = rng.randint(spa_l, spa_u)
        parts_idx = rng.sample(body_parts, cs)
        spa_idx = sorted(sum(parts_idx, []))
    elif spatial_mode == "random":
        spa_num = rng.randint(10, 15)
        spa_idx = sorted(rng.sample(list(range(v)), spa_num))
    else:
        raise ValueError(spatial_mode)
    ct = rng.randint(tem_l, min(tem_u, t // ds))
    tem_idx = rng.randint(0, t // ds - ct)

    randidx = (jnp.arange(n_batch) + n_shift) % n_batch
    spa_mask = jnp.zeros((v,), jnp.bool_).at[jnp.asarray(spa_idx)].set(True)
    t_small = jnp.arange(t // ds)
    tem_mask = (t_small >= tem_idx) & (t_small < tem_idx + ct)
    mask = tem_mask[:, None] & spa_mask[None, :]                        # [T//4, V]
    full_mask = jnp.repeat(tem_mask, ds)[:, None] & spa_mask[None, :]   # [T, V]
    mb = full_mask[None, None, :, :, None]
    if swap_mode == "swap":
        xst = jnp.where(mb, x[randidx], x)
    elif swap_mode == "zeros":
        xst = jnp.where(mb, jnp.zeros_like(x), x)
    else:
        raise ValueError(swap_mode)
    return randidx, xst, mask


@functools.partial(jax.jit, donate_argnums=(0, 1))
def _enqueue(queue, queue_label, keys, label, ptr):
    # in-place (donated) dequeue-and-enqueue: no full-queue copy per step;
    # writes in the queue's storage dtype (bf16) -> half-size transfer
    new_queue = jax.lax.dynamic_update_slice(queue, keys.T.astype(queue.dtype),
                                             (0, ptr))
    new_queue_label = jax.lax.dynamic_update_slice(
        queue_label, label.astype(queue_label.dtype), (ptr,))
    return new_queue, new_queue_label


def skeleton_clr_forward(state, im_q, im_k, label, rng):
    m_mom, temp, repeat = state["m"], state["T"], state["repeat"]
    queue, queue_label, ptr = state["queue"], state["queue_label"], state["queue_ptr"]
    d_in_pad = state["d_in_pad"]
    n_batch = im_q.shape[0]
    kk = queue.shape[1]
    inv_t = 1.0 / temp

    # ske_swap + pooled features (all on device)
    randidx_list = []
    feats = [pooled_features(im_q)]                       # row layout: [q; p_0; c_0; ...]
    for _ in range(repeat):
        randidx, im_pc, mask = ske_swap(im_q, rng)
        randidx_list.append(randidx)
        fp, fc = pooled_features(im_pc, mask)
        feats.append(fp)
        feats.append(fc)
    feat_qpc = _pad_cols(jnp.concatenate(feats, axis=0), d_in_pad)   # [(1+2R)*N, 128k]

    # one fused MLP + L2-norm kernel for q and every (p, c)   (bf16 weights)
    enc_q_bf = prep_kernel_params(state["enc_q"], d_in_pad)
    qpc = mlp_encode_normalize(enc_q_bf, feat_qpc, seg=n_batch)
    q = qpc[:n_batch]
    p_list = [qpc[(1 + 2 * i) * n_batch:(2 + 2 * i) * n_batch] for i in range(repeat)]
    c_list = [qpc[(2 + 2 * i) * n_batch:(3 + 2 * i) * n_batch] for i in range(repeat)]

    # momentum update of the key encoder (no-grad in torch), then encode keys.
    # new_enc_k is returned so the caller can write it back into state.
    new_enc_k = jax.tree_util.tree_map(
        lambda pk, pq: pk * m_mom + pq * (1.0 - m_mom), state["enc_k"], state["enc_q"])
    enc_k_bf = prep_kernel_params(new_enc_k, d_in_pad)
    k = mlp_encode_normalize(enc_k_bf,
                             _pad_cols(pooled_features(im_k), d_in_pad),
                             seg=n_batch)

    # single batched queue matmul (lane-dense, K-tiled, >=2 blocks, megacore)
    l_neg_all = queue_logits(qpc, queue, temp)            # [(1+2R)*N, K]

    def seg(a, i):
        return a[i * n_batch:(i + 1) * n_batch]

    def rowdot(a, b):
        # tiny per-row dot products: plain JAX (no masked-store kernel launch)
        return jnp.sum(a * b, axis=-1, keepdims=True) * inv_t

    logits = jnp.concatenate([rowdot(q, k), seg(l_neg_all, 0)], axis=1)
    logits_reg_p_list, logits_reg_c_list = [], []
    for i in range(repeat):
        p, c = p_list[i], c_list[i]
        logits_reg_p_list.append(jnp.concatenate(
            [rowdot(p, k[randidx_list[i]]), seg(l_neg_all, 1 + 2 * i), rowdot(p, c)],
            axis=1))
        logits_reg_c_list.append(jnp.concatenate(
            [rowdot(c, k), seg(l_neg_all, 2 + 2 * i), rowdot(c, p)], axis=1))

    topk_onehot = jnp.zeros((n_batch, kk), jnp.float32)
    ones_col = jnp.ones((n_batch, 1), jnp.float32)
    zeros_col = jnp.zeros((n_batch, 1), jnp.float32)
    pos_mask = jnp.concatenate([ones_col, topk_onehot], axis=1)
    pos_mask_reg_p = jnp.concatenate([ones_col, topk_onehot, zeros_col], axis=1)
    pos_mask_reg_c = jnp.concatenate([ones_col, topk_onehot, zeros_col], axis=1)
    target_mask = label[:, None].astype(jnp.float32) == queue_label[None, :]

    # functional _dequeue_and_enqueue (in-place via donation) + pointer advance
    new_queue, new_queue_label = _enqueue(queue, queue_label, k, label,
                                          jnp.asarray(ptr, jnp.int32))
    new_ptr = (ptr + n_batch) % kk

    return (logits, pos_mask, logits_reg_p_list, pos_mask_reg_p,
            logits_reg_c_list, pos_mask_reg_c, topk_onehot, target_mask,
            new_queue, new_queue_label, new_ptr, new_enc_k)


# ---------------------------------- main -------------------------------------
if __name__ == "__main__":
    pyrng = pyrandom.Random(0)
    key = jax.random.PRNGKey(0)

    # small but shape-consistent config (V=25 required by the NTU body parts);
    # N kept a multiple of 8 so BN segments stay sublane-aligned
    N, C_IN, T, V, M = 8, 3, 16, 25, 2
    FEATURE_DIM, DIM_MLP, K_QUEUE = 128, 128, 256
    TEMPERATURE, MOMENTUM, REPEAT = 0.07, 0.999, 1
    D_IN = C_IN * V
    D_IN_PAD = -(-D_IN // 128) * 128                      # 75 -> 128 lane padding

    k_q, k_k, k_lab, k_queue, k_enc = jax.random.split(key, 5)
    im_q = jax.random.normal(k_q, (N, C_IN, T, V, M), jnp.float32)
    im_k = jax.random.normal(k_k, (N, C_IN, T, V, M), jnp.float32)
    label = jax.random.randint(k_lab, (N,), 0, 60, jnp.int32)

    queue = jax.random.normal(k_queue, (FEATURE_DIM, K_QUEUE), jnp.float32)
    queue = queue / jnp.maximum(
        jnp.sqrt(jnp.sum(queue * queue, axis=0, keepdims=True)), 1e-12)
    queue = queue.astype(jnp.bfloat16)        # bf16 storage: half the HBM read bytes
    queue_label = jnp.zeros((K_QUEUE,), jnp.float32) - 1.0

    enc_q = init_encoder_params(k_enc, D_IN, DIM_MLP, FEATURE_DIM)
    enc_k = jax.tree_util.tree_map(lambda x: x, enc_q)    # param_k <- param_q copy

    state = dict(enc_q=enc_q, enc_k=enc_k, queue=queue, queue_label=queue_label,
                 queue_ptr=0, m=MOMENTUM, T=TEMPERATURE, repeat=REPEAT,
                 d_in_pad=D_IN_PAD)

    outs = skeleton_clr_forward(state, im_q, im_k, label, pyrng)
    (logits, pos_mask, logits_reg_p_list, pos_mask_reg_p,
     logits_reg_c_list, pos_mask_reg_c, topk_onehot, target_mask,
     new_queue, new_queue_label, new_ptr, new_enc_k) = outs

    jax.block_until_ready(logits)
    jax.block_until_ready(logits_reg_p_list[0])
    jax.block_until_ready(logits_reg_c_list[0])
    jax.block_until_ready(new_queue)
    jax.block_until_ready(new_enc_k["w0"])

    assert logits.shape == (N, 1 + K_QUEUE)
    assert logits_reg_p_list[0].shape == (N, 2 + K_QUEUE)
    assert logits_reg_c_list[0].shape == (N, 2 + K_QUEUE)
    assert pos_mask.shape == (N, 1 + K_QUEUE)
    assert pos_mask_reg_p.shape == (N, 2 + K_QUEUE)
    assert target_mask.shape == (N, K_QUEUE)
    assert new_queue.shape == (FEATURE_DIM, K_QUEUE)
    assert new_enc_k["w0"].shape == (D_IN, DIM_MLP)
    assert new_ptr == N % K_QUEUE
    assert bool(jnp.all(jnp.isfinite(logits)))
    assert bool(jnp.all(jnp.isfinite(logits_reg_p_list[0])))
    assert bool(jnp.all(jnp.isfinite(logits_reg_c_list[0])))

    print("KERNEL_OK")
</pallas_src>

<mosaic_0001>
module attributes {stable_mosaic.version = 11 : i64} {
  func.func @_mlp_norm_kernel(%arg0: i32, %arg1: memref<8x128xbf16, #tpu.memory_space<vmem>>, %arg2: memref<128x128xbf16, #tpu.memory_space<vmem>>, %arg3: memref<1x128xf32, #tpu.memory_space<vmem>>, %arg4: memref<128x128xbf16, #tpu.memory_space<vmem>>, %arg5: memref<1x128xf32, #tpu.memory_space<vmem>>, %arg6: memref<128x128xbf16, #tpu.memory_space<vmem>>, %arg7: memref<1x128xf32, #tpu.memory_space<vmem>>, %arg8: memref<8x128xf32, #tpu.memory_space<vmem>>) attributes {dimension_semantics = [#tpu.dimension_semantics<parallel>], iteration_bounds = array<i64: 3>, scalar_prefetch = 0 : i64, scratch_operands = 0 : i64, tpu.core_type = #tpu.core_type<tc>, window_params = [{transform_indices = @transform_0, window_bounds = array<i64: 8, 128>}, {pipeline_mode = #tpu.pipeline_mode<synchronous>, transform_indices = @transform_1, window_bounds = array<i64: 128, 128>}, {pipeline_mode = #tpu.pipeline_mode<synchronous>, transform_indices = @transform_2, window_bounds = array<i64: 1, 128>}, {pipeline_mode = #tpu.pipeline_mode<synchronous>, transform_indices = @transform_3, window_bounds = array<i64: 128, 128>}, {pipeline_mode = #tpu.pipeline_mode<synchronous>, transform_indices = @transform_4, window_bounds = array<i64: 1, 128>}, {pipeline_mode = #tpu.pipeline_mode<synchronous>, transform_indices = @transform_5, window_bounds = array<i64: 128, 128>}, {pipeline_mode = #tpu.pipeline_mode<synchronous>, transform_indices = @transform_6, window_bounds = array<i64: 1, 128>}, {transform_indices = @transform_7, window_bounds = array<i64: 8, 128>}]} {
    %c0 = arith.constant 0 : index
    %c0_0 = arith.constant 0 : index
    %0 = vector.load %arg1[%c0, %c0_0] : memref<8x128xbf16, #tpu.memory_space<vmem>>, vector<8x128xbf16>
    %c0_1 = arith.constant 0 : index
    %c0_2 = arith.constant 0 : index
    %1 = vector.load %arg2[%c0_1, %c0_2] : memref<128x128xbf16, #tpu.memory_space<vmem>>, vector<128x128xbf16>
    %cst = arith.constant dense<0.000000e+00> : vector<8x128xf32>
    %2 = tpu.matmul %0, %1, %cst {dimension_numbers = #tpu.dot_dimension_numbers<[1], [0], [0], [1], [0, 0, 1, 1], [], []>} : vector<8x128xbf16>, vector<128x128xbf16>, vector<8x128xf32> -> vector<8x128xf32>
    %c0_3 = arith.constant 0 : index
    %c0_4 = arith.constant 0 : index
    %3 = vector.load %arg3[%c0_3, %c0_4] : memref<1x128xf32, #tpu.memory_space<vmem>>, vector<1x128xf32>
    %4 = vector.broadcast %3 : vector<1x128xf32> to vector<8x128xf32>
    %5 = arith.addf %2, %4 : vector<8x128xf32>
    %cst_5 = arith.constant 0.000000e+00 : f32
    %6 = vector.broadcast %cst_5 : f32 to vector<8x128xf32>
    %7 = arith.maximumf %5, %6 : vector<8x128xf32>
    %8 = arith.truncf %7 : vector<8x128xf32> to vector<8x128xbf16>
    %c0_6 = arith.constant 0 : index
    %c0_7 = arith.constant 0 : index
    %9 = vector.load %arg4[%c0_6, %c0_7] : memref<128x128xbf16, #tpu.memory_space<vmem>>, vector<128x128xbf16>
    %cst_8 = arith.constant dense<0.000000e+00> : vector<8x128xf32>
    %10 = tpu.matmul %8, %9, %cst_8 {dimension_numbers = #tpu.dot_dimension_numbers<[1], [0], [0], [1], [0, 0, 1, 1], [], []>} : vector<8x128xbf16>, vector<128x128xbf16>, vector<8x128xf32> -> vector<8x128xf32>
    %c0_9 = arith.constant 0 : index
    %c0_10 = arith.constant 0 : index
    %11 = vector.load %arg5[%c0_9, %c0_10] : memref<1x128xf32, #tpu.memory_space<vmem>>, vector<1x128xf32>
    %12 = vector.broadcast %11 : vector<1x128xf32> to vector<8x128xf32>
    %13 = arith.addf %10, %12 : vector<8x128xf32>
    %cst_11 = arith.constant dense<0.000000e+00> : vector<128xf32>
    %14 = vector.multi_reduction <add>, %13, %cst_11 [0] : vector<8x128xf32> to vector<128xf32>
    %15 = vector.shape_cast %14 : vector<128xf32> to vector<1x128xf32>
    %cst_12 = arith.constant 8.000000e+00 : f32
    %16 = vector.broadcast %cst_12 : f32 to vector<1x128xf32>
    %17 = arith.divf %15, %16 : vector<1x128xf32>
    %18 = vector.broadcast %17 : vector<1x128xf32> to vector<8x128xf32>
    %19 = arith.subf %13, %18 : vector<8x128xf32>
    %20 = arith.mulf %19, %19 : vector<8x128xf32>
    %cst_13 = arith.constant dense<0.000000e+00> : vector<128xf32>
    %21 = vector.multi_reduction <add>, %20, %cst_13 [0] : vector<8x128xf32> to vector<128xf32>
    %22 = vector.shape_cast %21 : vector<128xf32> to vector<1x128xf32>
    %cst_14 = arith.constant 8.000000e+00 : f32
    %23 = vector.broadcast %cst_14 : f32 to vector<1x128xf32>
    %24 = arith.divf %22, %23 : vector<1x128xf32>
    %25 = vector.broadcast %17 : vector<1x128xf32> to vector<8x128xf32>
    %26 = arith.subf %13, %25 : vector<8x128xf32>
    %cst_15 = arith.constant 9.99999974E-6 : f32
    %27 = vector.broadcast %cst_15 : f32 to vector<1x128xf32>
    %28 = arith.addf %24, %27 : vector<1x128xf32>
    %29 = math.rsqrt %28 : vector<1x128xf32>
    %30 = vector.broadcast %29 : vector<1x128xf32> to vector<8x128xf32>
    %31 = arith.mulf %26, %30 : vector<8x128xf32>
    %cst_16 = arith.constant 0.000000e+00 : f32
    %32 = vector.broadcast %cst_16 : f32 to vector<8x128xf32>
    %33 = arith.maximumf %31, %32 : vector<8x128xf32>
    %34 = arith.truncf %33 : vector<8x128xf32> to vector<8x128xbf16>
    %c0_17 = arith.constant 0 : index
    %c0_18 = arith.constant 0 : index
    %35 = vector.load %arg6[%c0_17, %c0_18] : memref<128x128xbf16, #tpu.memory_space<vmem>>, vector<128x128xbf16>
    %cst_19 = arith.constant dense<0.000000e+00> : vector<8x128xf32>
    %36 = tpu.matmul %34, %35, %cst_19 {dimension_numbers = #tpu.dot_dimension_numbers<[1], [0], [0], [1], [0, 0, 1, 1], [], []>} : vector<8x128xbf16>, vector<128x128xbf16>, vector<8x128xf32> -> vector<8x128xf32>
    %c0_20 = arith.constant 0 : index
    %c0_21 = arith.constant 0 : index
    %37 = vector.load %arg7[%c0_20, %c0_21] : memref<1x128xf32, #tpu.memory_space<vmem>>, vector<1x128xf32>
    %38 = vector.broadcast %37 : vector<1x128xf32> to vector<8x128xf32>
    %39 = arith.addf %36, %38 : vector<8x128xf32>
    %40 = arith.mulf %39, %39 : vector<8x128xf32>
    %cst_22 = arith.constant dense<0.000000e+00> : vector<8xf32>
    %41 = vector.multi_reduction <add>, %40, %cst_22 [1] : vector<8x128xf32> to vector<8xf32>
    %42 = vector.shape_cast %41 : vector<8xf32> to vector<8x1xf32>
    %cst_23 = arith.constant 1.000000e-24 : f32
    %43 = vector.broadcast %cst_23 : f32 to vector<8x1xf32>
    %44 = arith.maximumf %42, %43 : vector<8x1xf32>
    %45 = math.rsqrt %44 : vector<8x1xf32>
    %46 = vector.broadcast %45 : vector<8x1xf32> to vector<8x128xf32>
    %47 = arith.mulf %39, %46 : vector<8x128xf32>
    %c0_24 = arith.constant 0 : index
    %c0_25 = arith.constant 0 : index
    %48 = vector.load %arg8[%c0_24, %c0_25] : memref<8x128xf32, #tpu.memory_space<vmem>>, vector<8x128xf32>
    tpu.vector_store %arg8[%c0_24, %c0_25], %47 {strides = array<i32>} : memref<8x128xf32, #tpu.memory_space<vmem>>, vector<8x128xf32>,
    return
  }
  func.func @transform_0(%arg0: i32) -> (i32, i32) {
    %c0_i32 = arith.constant 0 : i32
    %c0_i32_0 = arith.constant 0 : i32
    return %arg0, %c0_i32 : i32, i32
  }
  func.func @transform_1(%arg0: i32) -> (i32, i32) {
    %c0_i32 = arith.constant 0 : i32
    %c0_i32_0 = arith.constant 0 : i32
    %c0_i32_1 = arith.constant 0 : i32
    return %c0_i32, %c0_i32_0 : i32, i32
  }
  func.func @transform_2(%arg0: i32) -> (i32, i32) {
    %c0_i32 = arith.constant 0 : i32
    %c0_i32_0 = arith.constant 0 : i32
    %c0_i32_1 = arith.constant 0 : i32
    return %c0_i32, %c0_i32_0 : i32, i32
  }
  func.func @transform_3(%arg0: i32) -> (i32, i32) {
    %c0_i32 = arith.constant 0 : i32
    %c0_i32_0 = arith.constant 0 : i32
    %c0_i32_1 = arith.constant 0 : i32
    return %c0_i32, %c0_i32_0 : i32, i32
  }
  func.func @transform_4(%arg0: i32) -> (i32, i32) {
    %c0_i32 = arith.constant 0 : i32
    %c0_i32_0 = arith.constant 0 : i32
    %c0_i32_1 = arith.constant 0 : i32
    return %c0_i32, %c0_i32_0 : i32, i32
  }
  func.func @transform_5(%arg0: i32) -> (i32, i32) {
    %c0_i32 = arith.constant 0 : i32
    %c0_i32_0 = arith.constant 0 : i32
    %c0_i32_1 = arith.constant 0 : i32
    return %c0_i32, %c0_i32_0 : i32, i32
  }
  func.func @transform_6(%arg0: i32) -> (i32, i32) {
    %c0_i32 = arith.constant 0 : i32
    %c0_i32_0 = arith.constant 0 : i32
    %c0_i32_1 = arith.constant 0 : i32
    return %c0_i32, %c0_i32_0 : i32, i32
  }
  func.func @transform_7(%arg0: i32) -> (i32, i32) {
    %c0_i32 = arith.constant 0 : i32
    %c0_i32_0 = arith.constant 0 : i32
    return %arg0, %c0_i32 : i32, i32
  }
}

</mosaic_0001>

<llo_original>
// kernel: tpu_custom_call.1
$region0: #{tpu_custom_call.1}
  #allocation0 [shape = 'u32[]', space=smem, size = 0x4, offset = 0x4, fixed_abs, tag = 'smem constant byte address 0x4 - core index']
  #allocation1 [shape = 'u32[144,128]{1,0:T(1,128)}', space=vmem, size = 0x12000, scoped, tag = 'internal scratch']
  %s0 = inlined_call_operand.hbm [shape: bf16[24,128], index: 0, kind: input, shape index: {}]
  %s1 = inlined_call_operand.hbm [shape: bf16[128,128], index: 1, kind: input, shape index: {}]
  %s2 = inlined_call_operand.vmem [shape: f32[1,128], index: 2, kind: input, shape index: {}]
  %s3 = inlined_call_operand.hbm [shape: bf16[128,128], index: 3, kind: input, shape index: {}]
  %s4 = inlined_call_operand.vmem [shape: f32[1,128], index: 4, kind: input, shape index: {}]
  %s5 = inlined_call_operand.hbm [shape: bf16[128,128], index: 5, kind: input, shape index: {}]
  %s6 = inlined_call_operand.vmem [shape: f32[1,128], index: 6, kind: input, shape index: {}]
  %s7 = inlined_call_operand.hbm [shape: f32[24,128], index: 7, kind: output, shape index: {}]
  %s8 = sld [smem:[#allocation0]]
  $region77: #{tpu_custom_call.1} parent=0
    _
  %s10 = ssub.s32 1, %s8
  %s11 = scalar_select 0, %s10, %s8
  $region1: #{tpu_custom_call.1} parent=0
    #allocation2 [shape = 'u8[4096]{0}', space=vmem, size = 0x1000, scoped, tag = 'input window, operand 0']
    #allocation3 [shape = 's32[2]{0}', space=sflag, size = 0x8, scoped, tag = 'scoped memory for tpu_custom_call.1']
    #allocation4 [shape = 's32[2]{0}', space=sflag, size = 0x8, scoped, tag = 'scoped memory for tpu_custom_call.1']
    #allocation5 [shape = 'u8[32768]{0}', space=vmem, size = 0x8000, scoped, tag = 'input window, operand 1, single buffered']
    #allocation6 [shape = 's32[1]{0}', space=sflag, size = 0x4, scoped, tag = 'scoped memory for tpu_custom_call.1']
    #allocation7 [shape = 'u8[32768]{0}', space=vmem, size = 0x8000, scoped, tag = 'input window, operand 3, single buffered']
    #allocation8 [shape = 'u8[32768]{0}', space=vmem, size = 0x8000, scoped, tag = 'input window, operand 5, single buffered']
    #allocation9 [shape = 's32[1]{0}', space=sflag, size = 0x4, scoped, tag = 'scoped memory for tpu_custom_call.1']
    #allocation10 [shape = 'u8[8192]{0}', space=vmem, size = 0x2000, scoped, tag = 'output window, operand 0']
    %12 = vsyncpa [#allocation3], 0
    %s13 = scalar_lea.sflag [#allocation3], 1
    %14 = vsyncpa %s13, 0
    %15 = vsyncpa [#allocation6], 0
    %16 = vsyncpa [#allocation9], 0
    %17 = vsyncpa [#allocation4], 0
    %s18 = scalar_lea.sflag [#allocation4], 1
    %19 = vsyncpa %s18, 0
    loop: start=0, step=1, limit=5
    $region2: #{tpu_custom_call.1} parent=1 // loop_pre_header
      _
    $region3: #{tpu_custom_call.1} parent=1 // loop_header
      %s21 = sphi 0, %s25
      %p22 = scmp.ge.s32.totalorder %s21, 5
      %s31 = sphi 0, %s33
      %s34 = sphi 0, %s31
      %s35 = sphi 0, %s34
      %s51 = sphi 0, %s35
      %s55 = sphi 0, %s55
      %s57 = sphi 0, %s55
      %s58 = sphi 0, %s57
      %s72 = sphi 0, %s58
      %s76 = sphi 0, %s76
      %s78 = sphi 0, %s76
      %s79 = sphi 0, %s78
      %s93 = sphi 0, %s79
      %s97 = sphi 0, %s97
      %s99 = sphi 0, %s97
      %s100 = sphi 0, %s99
      %s114 = sphi 0, %s100
      %s118 = sphi 0, %s118
      %s120 = sphi 0, %s118
      %s121 = sphi 0, %s120
      %s135 = sphi 0, %s121
      %s139 = sphi 0, %s139
      %s141 = sphi 0, %s139
      %s142 = sphi 0, %s141
      %s156 = sphi 0, %s142
      %s160 = sphi 0, %s160
      %s162 = sphi 0, %s160
      %s163 = sphi 0, %s162
      %s177 = sphi 0, %s163
      %s183 = sphi 0, %s185
      %s186 = sphi 0, %s183
      %s187 = sphi 0, %s186
      %s203 = sphi 0, %s187
    $region4: #{tpu_custom_call.1} parent=1 // loop_header_branch
      %24 = sbr.rel (%p22) target = $region8
    $region5: #{tpu_custom_call.1} parent=1 // loop_body
      %s26 = ssub.s32 %s21, 1
      %s27 = ssub.s32 %s21, 2
      %s28 = sadd.s32 %s21, 1
      %s29 = ssub.s32 %s21, %s28
      %p30 = scmp.eq.s32.totalorder %s29, 0
      %s32 = sadd.s32 %s31, 1
      %s33 = scalar_select %p30, %s31, %s32
      %p36 = pneg %p30
      %p37 = scmp.eq.s32.totalorder %s21, 2
      %p38 = por %p36, %p37
      %p39 = scmp.ne.s32.totalorder %s31, %s34
      %p40 = scmp.eq.s32.totalorder %s21, 0
      %p41 = por %p39, %p40
      %p42 = scmp.ne.s32.totalorder %s31, %s34
      %p43 = scmp.eq.s32.totalorder %s26, 2
      %p44 = por %p42, %p43
      %p45 = scmp.ne.s32.totalorder %s34, %s35
      %p46 = scmp.eq.s32.totalorder %s26, 0
      %p47 = por %p45, %p46
      %p48 = scmp.ne.s32.totalorder %s34, %s35
      %p49 = scmp.eq.s32.totalorder %s27, 2
      %p50 = por %p48, %p49
      %p52 = scmp.ne.s32.totalorder %s35, %s51
      %p53 = scmp.eq.s32.totalorder %s27, 0
      %p54 = por %p52, %p53
      %s56 = sadd.s32 %s55, 1
      %p59 = scmp.eq.s32.totalorder %s21, 2
      %p60 = scmp.ne.s32.totalorder %s55, %s57
      %p61 = scmp.eq.s32.totalorder %s21, 0
      %p62 = por %p60, %p61
      %p63 = scmp.ne.s32.totalorder %s55, %s57
      %p64 = scmp.eq.s32.totalorder %s26, 2
      %p65 = por %p63, %p64
      %p66 = scmp.ne.s32.totalorder %s57, %s58
      %p67 = scmp.eq.s32.totalorder %s26, 0
      %p68 = por %p66, %p67
      %p69 = scmp.ne.s32.totalorder %s57, %s58
      %p70 = scmp.eq.s32.totalorder %s27, 2
      %p71 = por %p69, %p70
      %p73 = scmp.ne.s32.totalorder %s58, %s72
      %p74 = scmp.eq.s32.totalorder %s27, 0
      %p75 = por %p73, %p74
      %s77 = sadd.s32 %s76, 1
      %p80 = scmp.eq.s32.totalorder %s21, 2
      %p81 = scmp.ne.s32.totalorder %s76, %s78
      %p82 = scmp.eq.s32.totalorder %s21, 0
      %p83 = por %p81, %p82
      %p84 = scmp.ne.s32.totalorder %s76, %s78
      %p85 = scmp.eq.s32.totalorder %s26, 2
      %p86 = por %p84, %p85
      %p87 = scmp.ne.s32.totalorder %s78, %s79
      %p88 = scmp.eq.s32.totalorder %s26, 0
      %p89 = por %p87, %p88
      %p90 = scmp.ne.s32.totalorder %s78, %s79
      %p91 = scmp.eq.s32.totalorder %s27, 2
      %p92 = por %p90, %p91
      %p94 = scmp.ne.s32.totalorder %s79, %s93
      %p95 = scmp.eq.s32.totalorder %s27, 0
      %p96 = por %p94, %p95
      %s98 = sadd.s32 %s97, 1
      %p101 = scmp.eq.s32.totalorder %s21, 2
      %p102 = scmp.ne.s32.totalorder %s97, %s99
      %p103 = scmp.eq.s32.totalorder %s21, 0
      %p104 = por %p102, %p103
      %p105 = scmp.ne.s32.totalorder %s97, %s99
      %p106 = scmp.eq.s32.totalorder %s26, 2
      %p107 = por %p105, %p106
      %p108 = scmp.ne.s32.totalorder %s99, %s100
      %p109 = scmp.eq.s32.totalorder %s26, 0
      %p110 = por %p108, %p109
      %p111 = scmp.ne.s32.totalorder %s99, %s100
      %p112 = scmp.eq.s32.totalorder %s27, 2
      %p113 = por %p111, %p112
      %p115 = scmp.ne.s32.totalorder %s100, %s114
      %p116 = scmp.eq.s32.totalorder %s27, 0
      %p117 = por %p115, %p116
      %s119 = sadd.s32 %s118, 1
      %p122 = scmp.eq.s32.totalorder %s21, 2
      %p123 = scmp.ne.s32.totalorder %s118, %s120
      %p124 = scmp.eq.s32.totalorder %s21, 0
      %p125 = por %p123, %p124
      %p126 = scmp.ne.s32.totalorder %s118, %s120
      %p127 = scmp.eq.s32.totalorder %s26, 2
      %p128 = por %p126, %p127
      %p129 = scmp.ne.s32.totalorder %s120, %s121
      %p130 = scmp.eq.s32.totalorder %s26, 0
      %p131 = por %p129, %p130
      %p132 = scmp.ne.s32.totalorder %s120, %s121
      %p133 = scmp.eq.s32.totalorder %s27, 2
      %p134 = por %p132, %p133
      %p136 = scmp.ne.s32.totalorder %s121, %s135
      %p137 = scmp.eq.s32.totalorder %s27, 0
      %p138 = por %p136, %p137
      %s140 = sadd.s32 %s139, 1
      %p143 = scmp.eq.s32.totalorder %s21, 2
      %p144 = scmp.ne.s32.totalorder %s139, %s141
      %p145 = scmp.eq.s32.totalorder %s21, 0
      %p146 = por %p144, %p145
      %p147 = scmp.ne.s32.totalorder %s139, %s141
      %p148 = scmp.eq.s32.totalorder %s26, 2
      %p149 = por %p147, %p148
      %p150 = scmp.ne.s32.totalorder %s141, %s142
      %p151 = scmp.eq.s32.totalorder %s26, 0
      %p152 = por %p150, %p151
      %p153 = scmp.ne.s32.totalorder %s141, %s142
      %p154 = scmp.eq.s32.totalorder %s27, 2
      %p155 = por %p153, %p154
      %p157 = scmp.ne.s32.totalorder %s142, %s156
      %p158 = scmp.eq.s32.totalorder %s27, 0
      %p159 = por %p157, %p158
      %s161 = sadd.s32 %s160, 1
      %p164 = scmp.eq.s32.totalorder %s21, 2
      %p165 = scmp.ne.s32.totalorder %s160, %s162
      %p166 = scmp.eq.s32.totalorder %s21, 0
      %p167 = por %p165, %p166
      %p168 = scmp.ne.s32.totalorder %s160, %s162
      %p169 = scmp.eq.s32.totalorder %s26, 2
      %p170 = por %p168, %p169
      %p171 = scmp.ne.s32.totalorder %s162, %s163
      %p172 = scmp.eq.s32.totalorder %s26, 0
      %p173 = por %p171, %p172
      %p174 = scmp.ne.s32.totalorder %s162, %s163
      %p175 = scmp.eq.s32.totalorder %s27, 2
      %p176 = por %p174, %p175
      %p178 = scmp.ne.s32.totalorder %s163, %s177
      %p179 = scmp.eq.s32.totalorder %s27, 0
      %p180 = por %p178, %p179
      %s181 = ssub.s32 %s21, %s28
      %p182 = scmp.eq.s32.totalorder %s181, 0
      %s184 = sadd.s32 %s183, 1
      %s185 = scalar_select %p182, %s183, %s184
      %p188 = pneg %p182
      %p189 = scmp.eq.s32.totalorder %s21, 2
      %p190 = por %p188, %p189
      %p191 = scmp.ne.s32.totalorder %s183, %s186
      %p192 = scmp.eq.s32.totalorder %s21, 0
      %p193 = por %p191, %p192
      %p194 = scmp.ne.s32.totalorder %s183, %s186
      %p195 = scmp.eq.s32.totalorder %s26, 2
      %p196 = por %p194, %p195
      %p197 = scmp.ne.s32.totalorder %s186, %s187
      %p198 = scmp.eq.s32.totalorder %s26, 0
      %p199 = por %p197, %p198
      %p200 = scmp.ne.s32.totalorder %s186, %s187
      %p201 = scmp.eq.s32.totalorder %s27, 2
      %p202 = por %p200, %p201
      %p204 = scmp.ne.s32.totalorder %s187, %s203
      %p205 = scmp.eq.s32.totalorder %s27, 0
      %p206 = por %p204, %p205
      %p207 = scmp.le.s32.totalorder 1, %s21
      %p208 = scmp.lt.s32.totalorder %s21, 4
      %p209 = pnand %p207, %p208
      %p210 = pneg %p209
      // Predicated region
      $region9: #{tpu_custom_call.1} parent=5 // pred_check
        _
      $region10: #{tpu_custom_call.1} parent=5 // pred_check_branch
        %212 = sbr.rel (%p209) target = $region12
      $region11: #{tpu_custom_call.1} parent=5 // pred_region
        %s213 = ssub.s32 %s21, 1
        // Predicated region
        $region13: #{tpu_custom_call.1} parent=11 // pred_check
          %p214 = pneg %p68
        $region14: #{tpu_custom_call.1} parent=11 // pred_check_branch
          %216 = sbr.rel (%p214) target = $region16
        $region15: #{tpu_custom_call.1} parent=11 // pred_region
          %s218 = ssub.s32 1024, 1024
          %219 = vsyncadd [#allocation6], %s218
          %s220 = sshll.u32 [#allocation5], 4
          %s221 = int_to_ptr.vmem [resolvable:$true] %s220
          %226 = dma.hbm_to_vmem [thread:$0]  %s1, 1024, %s221, [#allocation6], 64, 64, 4
        $region16: #{tpu_custom_call.1} parent=11 // pred_fallthru
          _
        // Predicated region
        $region17: #{tpu_custom_call.1} parent=11 // pred_check
          %p227 = pneg %p89
        $region18: #{tpu_custom_call.1} parent=11 // pred_check_branch
          %229 = sbr.rel (%p227) target = $region20
        $region19: #{tpu_custom_call.1} parent=11 // pred_region
          _
        $region20: #{tpu_custom_call.1} parent=11 // pred_fallthru
          _
        // Predicated region
        $region21: #{tpu_custom_call.1} parent=11 // pred_check
          %p230 = pneg %p110
        $region22: #{tpu_custom_call.1} parent=11 // pred_check_branch
          %232 = sbr.rel (%p230) target = $region24
        $region23: #{tpu_custom_call.1} parent=11 // pred_region
          %s234 = ssub.s32 1024, 1024
          %235 = vsyncadd [#allocation6], %s234
          %s236 = sshll.u32 [#allocation7], 4
          %s237 = int_to_ptr.vmem [resolvable:$true] %s236
          %242 = dma.hbm_to_vmem [thread:$0]  %s3, 1024, %s237, [#allocation6], 64, 64, 4
        $region24: #{tpu_custom_call.1} parent=11 // pred_fallthru
          _
        // Predicated region
        $region25: #{tpu_custom_call.1} parent=11 // pred_check
          %p243 = pneg %p131
        $region26: #{tpu_custom_call.1} parent=11 // pred_check_branch
          %245 = sbr.rel (%p243) target = $region28
        $region27: #{tpu_custom_call.1} parent=11 // pred_region
          _
        $region28: #{tpu_custom_call.1} parent=11 // pred_fallthru
          _
        // Predicated region
        $region29: #{tpu_custom_call.1} parent=11 // pred_check
          %p246 = pneg %p152
        $region30: #{tpu_custom_call.1} parent=11 // pred_check_branch
          %248 = sbr.rel (%p246) target = $region32
        $region31: #{tpu_custom_call.1} parent=11 // pred_region
          %s250 = ssub.s32 1024, 1024
          %251 = vsyncadd [#allocation9], %s250
          %s252 = sshll.u32 [#allocation8], 4
          %s253 = int_to_ptr.vmem [resolvable:$true] %s252
          %258 = dma.hbm_to_vmem [thread:$0]  %s5, 1024, %s253, [#allocation9], 64, 64, 4
        $region32: #{tpu_custom_call.1} parent=11 // pred_fallthru
          _
        // Predicated region
        $region33: #{tpu_custom_call.1} parent=11 // pred_check
          %p259 = pneg %p173
        $region34: #{tpu_custom_call.1} parent=11 // pred_check_branch
          %261 = sbr.rel (%p259) target = $region36
        $region35: #{tpu_custom_call.1} parent=11 // pred_region
          _
        $region36: #{tpu_custom_call.1} parent=11 // pred_fallthru
          _
      $region12: #{tpu_custom_call.1} parent=5 // pred_fallthru
        _
      %p262 = scmp.lt.s32.totalorder %s21, 3
      // Predicated region
      $region37: #{tpu_custom_call.1} parent=5 // pred_check
        %p263 = pneg %p262
      $region38: #{tpu_custom_call.1} parent=5 // pred_check_branch
        %265 = sbr.rel (%p263) target = $region40
      $region39: #{tpu_custom_call.1} parent=5 // pred_region
        // Predicated region
        $region41: #{tpu_custom_call.1} parent=39 // pred_check
          %p266 = pneg %p41
        $region42: #{tpu_custom_call.1} parent=39 // pred_check_branch
          %268 = sbr.rel (%p266) target = $region44
        $region43: #{tpu_custom_call.1} parent=39 // pred_region
          %s269 = sand.u32 %s31, 1
          %s270 = scalar_lea.sflag [#allocation3], %s269
          %s271 = sand.u32 %s31, 1
          %s272 = smul.addr %s271, 4
          %s273 = scalar_lea.vmem [#allocation2], %s272
          %s275 = ssub.s32 64, 64
          %276 = vsyncadd %s270, %s275
          %s277 = smul.addr %s21, 64
          %s278 = scalar_lea.hbm %s0, %s277
          %s280 = sshll.u32 %s273, 4
          %s281 = int_to_ptr.vmem [resolvable:$true] %s280
          %283 = dma.hbm_to_vmem [thread:$0]  %s278, 64, %s281, %s270
        $region44: #{tpu_custom_call.1} parent=39 // pred_fallthru
          _
      $region40: #{tpu_custom_call.1} parent=5 // pred_fallthru
        _
      %p284 = scmp.le.s32.totalorder 1, %s21
      %p285 = scmp.lt.s32.totalorder %s21, 4
      %p286 = pnand %p284, %p285
      %p287 = pneg %p286
      // Predicated region
      $region45: #{tpu_custom_call.1} parent=5 // pred_check
        _
      $region46: #{tpu_custom_call.1} parent=5 // pred_check_branch
        %289 = sbr.rel (%p286) target = $region48
      $region47: #{tpu_custom_call.1} parent=5 // pred_region
        %s290 = ssub.s32 %s21, 1
        %s291 = sand.u32 %s34, 1
        %s292 = scalar_lea.sflag [#allocation3], %s291
        %s293 = sand.u32 %s34, 1
        %s294 = smul.addr %s293, 4
        %s295 = scalar_lea.vmem [#allocation2], %s294
        // Predicated region
        $region49: #{tpu_custom_call.1} parent=47 // pred_check
          %p296 = pneg %p47
        $region50: #{tpu_custom_call.1} parent=47 // pred_check_branch
          %298 = sbr.rel (%p296) target = $region52
        $region51: #{tpu_custom_call.1} parent=47 // pred_region
          %299 = dma.done %s292, 64
        $region52: #{tpu_custom_call.1} parent=47 // pred_fallthru
          _
        // Predicated region
        $region53: #{tpu_custom_call.1} parent=47 // pred_check
          %p300 = pneg %p68
        $region54: #{tpu_custom_call.1} parent=47 // pred_check_branch
          %302 = sbr.rel (%p300) target = $region56
        $region55: #{tpu_custom_call.1} parent=47 // pred_region
          %303 = dma.done [#allocation6], 1024
        $region56: #{tpu_custom_call.1} parent=47 // pred_fallthru
          _
        // Predicated region
        $region57: #{tpu_custom_call.1} parent=47 // pred_check
          %p304 = pneg %p110
        $region58: #{tpu_custom_call.1} parent=47 // pred_check_branch
          %306 = sbr.rel (%p304) target = $region60
        $region59: #{tpu_custom_call.1} parent=47 // pred_region
          %307 = dma.done [#allocation6], 1024
        $region60: #{tpu_custom_call.1} parent=47 // pred_fallthru
          _
        // Predicated region
        $region61: #{tpu_custom_call.1} parent=47 // pred_check
          %p308 = pneg %p152
        $region62: #{tpu_custom_call.1} parent=47 // pred_check_branch
          %310 = sbr.rel (%p308) target = $region64
        $region63: #{tpu_custom_call.1} parent=47 // pred_region
          %311 = dma.done [#allocation9], 1024
        $region64: #{tpu_custom_call.1} parent=47 // pred_fallthru
          _
        %s312 = sand.u32 %s34, 1
        %s313 = scalar_lea.sflag [#allocation3], %s312
        %s314 = sand.u32 %s34, 1
        %s315 = smul.addr %s314, 4
        %s316 = scalar_lea.vmem [#allocation2], %s315
        %p317 = pneg %p47
        %p318 = pneg %p44
        %p319 = pneg %p68
        %p320 = pneg %p65
        %p321 = pneg %p89
        %p322 = pneg %p86
        %p323 = pneg %p110
        %p324 = pneg %p107
        %p325 = pneg %p131
        %p326 = pneg %p128
        %p327 = pneg %p152
        %p328 = pneg %p149
        %p329 = pneg %p173
        %p330 = pneg %p170
        %p331 = pneg %p199
        %p332 = pneg %p196
        %s333 = sand.u32 %s186, 1
        %s334 = scalar_lea.sflag [#allocation4], %s333
        %s335 = sand.u32 %s186, 1
        %s336 = smul.addr %s335, 8
        %s337 = scalar_lea.vmem [#allocation10], %s336
        %v339 = vld [vmem:[%s295] sm:$0xf]
        %v340 = vld [vmem:[#allocation5] sm:$0xf]
        %v341 = vld [vmem:[#allocation5 + $0x4] sm:$0xf]
        %v342 = vld [vmem:[#allocation5 + $0x8] sm:$0xf]
        %v343 = vld [vmem:[#allocation5 + $0xc] sm:$0xf]
        %v344 = vld [vmem:[#allocation5 + $0x10] sm:$0xf]
        %v345 = vld [vmem:[#allocation5 + $0x14] sm:$0xf]
        %v346 = vld [vmem:[#allocation5 + $0x18] sm:$0xf]
        %v347 = vld [vmem:[#allocation5 + $0x1c] sm:$0xf]
        %v348 = vld [vmem:[#allocation5 + $0x20] sm:$0xf]
        %v349 = vld [vmem:[#allocation5 + $0x24] sm:$0xf]
        %v350 = vld [vmem:[#allocation5 + $0x28] sm:$0xf]
        %v351 = vld [vmem:[#allocation5 + $0x2c] sm:$0xf]
        %v352 = vld [vmem:[#allocation5 + $0x30] sm:$0xf]
        %v353 = vld [vmem:[#allocation5 + $0x34] sm:$0xf]
        %v354 = vld [vmem:[#allocation5 + $0x38] sm:$0xf]
        %v355 = vld [vmem:[#allocation5 + $0x3c] sm:$0xf]
        %v356 = vld [vmem:[%s2] sm:$0x1]
        %v358 = vlaneseq
        %v359 = vshrl.u32 %v358, 7
        %v360 = vsub.s32 0, %v359
        %v361 = vrot.slane %v356, %v360
        %v379 = vunpack.c.l.b16 %v340
        %v380 = vunpack.c.l.b16 %v341
        %v381 = vunpack.c.l.b16 %v342
        %v382 = vunpack.c.l.b16 %v343
        %v383 = vunpack.c.l.b16 %v344
        %v384 = vunpack.c.l.b16 %v345
        %v385 = vunpack.c.l.b16 %v346
        %v386 = vunpack.c.l.b16 %v347
        %v387 = vunpack.c.l.b16 %v348
        %v388 = vunpack.c.l.b16 %v349
        %v389 = vunpack.c.l.b16 %v350
        %v390 = vunpack.c.l.b16 %v351
        %v391 = vunpack.c.l.b16 %v352
        %v392 = vunpack.c.l.b16 %v353
        %v393 = vunpack.c.l.b16 %v354
        %v394 = vunpack.c.l.b16 %v355
        %v395 = vpack.c.b16 %v380, %v379
        %v396 = vpack.c.b16 %v382, %v381
        %v397 = vpack.c.b16 %v384, %v383
        %v398 = vpack.c.b16 %v386, %v385
        %v399 = vpack.c.b16 %v388, %v387
        %v400 = vpack.c.b16 %v390, %v389
        %v401 = vpack.c.b16 %v392, %v391
        %v402 = vpack.c.b16 %v394, %v393
        %411 = vmatprep.subr.bf16.mxu0 0
        %412 = vmatpush1.bf16.msra.mxu0 %v395
        %413 = vmatprep.subr.bf16.mxu0 0
        %414 = vmatpush1.bf16.msra.mxu0 %v396
        %415 = vmatprep.subr.bf16.mxu0 0
        %416 = vmatpush1.bf16.msra.mxu0 %v397
        %417 = vmatprep.subr.bf16.mxu0 0
        %418 = vmatpush1.bf16.msra.mxu0 %v398
        %419 = vmatprep.subr.bf16.mxu0 0
        %420 = vmatpush1.bf16.msra.mxu0 %v399
        %421 = vmatprep.subr.bf16.mxu0 0
        %422 = vmatpush1.bf16.msra.mxu0 %v400
        %423 = vmatprep.subr.bf16.mxu0 0
        %424 = vmatpush1.bf16.msra.mxu0 %v401
        %425 = vmatprep.subr.bf16.mxu0 0
        %426 = vmatpush1.bf16.msra.mxu0 %v402
        %427 = vmatprep.subr.bf16.mxu0 0
        %428 = vmatpush1.bf16.msra.mxu0 0
        %429 = vmatprep.subr.bf16.mxu0 0
        %430 = vmatpush1.bf16.msra.mxu0 0
        %431 = vmatprep.subr.bf16.mxu0 0
        %432 = vmatpush1.bf16.msra.mxu0 0
        %433 = vmatprep.subr.bf16.mxu0 0
        %434 = vmatpush1.bf16.msra.mxu0 0
        %435 = vmatprep.subr.bf16.mxu0 0
        %436 = vmatpush1.bf16.msra.mxu0 0
        %437 = vmatprep.subr.bf16.mxu0 0
        %438 = vmatpush1.bf16.msra.mxu0 0
        %439 = vmatprep.subr.bf16.mxu0 0
        %440 = vmatpush1.bf16.msra.mxu0 0
        %441 = vmatprep.subr.bf16.mxu0 0
        %442 = vmatpush1.bf16.msra.mxu0 0
        %443 = vmatprep.mubr.bf16.mxu0 0
        %444 = vmatmul.mubr.bf16.gmra.mrb[0].mxu0 %v339
        %v445 = vpop.f32.mrb[0].mxu0
        %v446 = vadd.f32 %v361, %v445
        %v447 = vpop.f32.mrb[0].mxu0
        %v448 = vpop.f32.mrb[0].mxu0
        %v449 = vpop.f32.mrb[0].mxu0
        %450 = vdwg.mxu0
        %v451 = vmax.f32 %v446, 0.0
        %v452 = vpack.c.bf16 %v451, %v451
        %v453 = vld [vmem:[#allocation7] sm:$0xf]
        %v454 = vld [vmem:[#allocation7 + $0x4] sm:$0xf]
        %v455 = vld [vmem:[#allocation7 + $0x8] sm:$0xf]
        %v456 = vld [vmem:[#allocation7 + $0xc] sm:$0xf]
        %v457 = vld [vmem:[#allocation7 + $0x10] sm:$0xf]
        %v458 = vld [vmem:[#allocation7 + $0x14] sm:$0xf]
        %v459 = vld [vmem:[#allocation7 + $0x18] sm:$0xf]
        %v460 = vld [vmem:[#allocation7 + $0x1c] sm:$0xf]
        %v461 = vld [vmem:[#allocation7 + $0x20] sm:$0xf]
        %v462 = vld [vmem:[#allocation7 + $0x24] sm:$0xf]
        %v463 = vld [vmem:[#allocation7 + $0x28] sm:$0xf]
        %v464 = vld [vmem:[#allocation7 + $0x2c] sm:$0xf]
        %v465 = vld [vmem:[#allocation7 + $0x30] sm:$0xf]
        %v466 = vld [vmem:[#allocation7 + $0x34] sm:$0xf]
        %v467 = vld [vmem:[#allocation7 + $0x38] sm:$0xf]
        %v468 = vld [vmem:[#allocation7 + $0x3c] sm:$0xf]
        %v469 = vld [vmem:[%s4] sm:$0x1]
        %v471 = vlaneseq
        %v472 = vshrl.u32 %v471, 7
        %v473 = vsub.s32 0, %v472
        %v474 = vrot.slane %v469, %v473
        %v492 = vunpack.c.l.b16 %v453
        %v493 = vunpack.c.l.b16 %v454
        %v494 = vunpack.c.l.b16 %v455
        %v495 = vunpack.c.l.b16 %v456
        %v496 = vunpack.c.l.b16 %v457
        %v497 = vunpack.c.l.b16 %v458
        %v498 = vunpack.c.l.b16 %v459
        %v499 = vunpack.c.l.b16 %v460
        %v500 = vunpack.c.l.b16 %v461
        %v501 = vunpack.c.l.b16 %v462
        %v502 = vunpack.c.l.b16 %v463
        %v503 = vunpack.c.l.b16 %v464
        %v504 = vunpack.c.l.b16 %v465
        %v505 = vunpack.c.l.b16 %v466
        %v506 = vunpack.c.l.b16 %v467
        %v507 = vunpack.c.l.b16 %v468
        %v508 = vpack.c.b16 %v493, %v492
        %v509 = vpack.c.b16 %v495, %v494
        %v510 = vpack.c.b16 %v497, %v496
        %v511 = vpack.c.b16 %v499, %v498
        %v512 = vpack.c.b16 %v501, %v500
        %v513 = vpack.c.b16 %v503, %v502
        %v514 = vpack.c.b16 %v505, %v504
        %v515 = vpack.c.b16 %v507, %v506
        %524 = vmatprep.subr.bf16.mxu0 0
        %525 = vmatpush1.bf16.msra.mxu0 %v508
        %526 = vmatprep.subr.bf16.mxu0 0
        %527 = vmatpush1.bf16.msra.mxu0 %v509
        %528 = vmatprep.subr.bf16.mxu0 0
        %529 = vmatpush1.bf16.msra.mxu0 %v510
        %530 = vmatprep.subr.bf16.mxu0 0
        %531 = vmatpush1.bf16.msra.mxu0 %v511
        %532 = vmatprep.subr.bf16.mxu0 0
        %533 = vmatpush1.bf16.msra.mxu0 %v512
        %534 = vmatprep.subr.bf16.mxu0 0
        %535 = vmatpush1.bf16.msra.mxu0 %v513
        %536 = vmatprep.subr.bf16.mxu0 0
        %537 = vmatpush1.bf16.msra.mxu0 %v514
        %538 = vmatprep.subr.bf16.mxu0 0
        %539 = vmatpush1.bf16.msra.mxu0 %v515
        %540 = vmatprep.subr.bf16.mxu0 0
        %541 = vmatpush1.bf16.msra.mxu0 0
        %542 = vmatprep.subr.bf16.mxu0 0
        %543 = vmatpush1.bf16.msra.mxu0 0
        %544 = vmatprep.subr.bf16.mxu0 0
        %545 = vmatpush1.bf16.msra.mxu0 0
        %546 = vmatprep.subr.bf16.mxu0 0
        %547 = vmatpush1.bf16.msra.mxu0 0
        %548 = vmatprep.subr.bf16.mxu0 0
        %549 = vmatpush1.bf16.msra.mxu0 0
        %550 = vmatprep.subr.bf16.mxu0 0
        %551 = vmatpush1.bf16.msra.mxu0 0
        %552 = vmatprep.subr.bf16.mxu0 0
        %553 = vmatpush1.bf16.msra.mxu0 0
        %554 = vmatprep.subr.bf16.mxu0 0
        %555 = vmatpush1.bf16.msra.mxu0 0
        %556 = vmatprep.mubr.bf16.mxu0 0
        %557 = vmatmul.mubr.bf16.gmra.mrb[0].mxu0 %v452
        %v558 = vpop.f32.mrb[0].mxu0
        %v559 = vadd.f32 %v474, %v558
        %v560 = vpop.f32.mrb[0].mxu0
        %v561 = vpop.f32.mrb[0].mxu0
        %v562 = vpop.f32.mrb[0].mxu0
        %563 = vdwg.mxu0
        %v564 = vrot.slane %v559, 4
        %v565 = vadd.f32 %v559, %v564
        %v566 = vrot.slane %v565, 2
        %v567 = vadd.f32 %v565, %v566
        %v568 = vrot.slane %v567, 1
        %v569 = vadd.f32 %v567, %v568
        %v570 = vrcp.pop 8.0
        %v571 = vmul.f32 %v569, %v570
        %v572 = vsub.f32 %v559, %v571
        %v573 = vmul.f32 %v572, %v572
        %v574 = vrot.slane %v573, 4
        %v575 = vadd.f32 %v573, %v574
        %v576 = vrot.slane %v575, 2
        %v577 = vadd.f32 %v575, %v576
        %v578 = vrot.slane %v577, 1
        %v579 = vadd.f32 %v577, %v578
        %v580 = vmul.f32 %v579, %v570
        %v581 = vadd.f32 %v580, 1e-05
        %v582 = vrsqrt.pop %v581
        %v583 = vmul.f32 %v572, %v582
        %v584 = vmax.f32 %v583, 0.0
        %v585 = vpack.c.bf16 %v584, %v584
        %v586 = vld [vmem:[#allocation8] sm:$0xf]
        %v587 = vld [vmem:[#allocation8 + $0x4] sm:$0xf]
        %v588 = vld [vmem:[#allocation8 + $0x8] sm:$0xf]
        %v589 = vld [vmem:[#allocation8 + $0xc] sm:$0xf]
        %v590 = vld [vmem:[#allocation8 + $0x10] sm:$0xf]
        %v591 = vld [vmem:[#allocation8 + $0x14] sm:$0xf]
        %v592 = vld [vmem:[#allocation8 + $0x18] sm:$0xf]
        %v593 = vld [vmem:[#allocation8 + $0x1c] sm:$0xf]
        %v594 = vld [vmem:[#allocation8 + $0x20] sm:$0xf]
        %v595 = vld [vmem:[#allocation8 + $0x24] sm:$0xf]
        %v596 = vld [vmem:[#allocation8 + $0x28] sm:$0xf]
        %v597 = vld [vmem:[#allocation8 + $0x2c] sm:$0xf]
        %v598 = vld [vmem:[#allocation8 + $0x30] sm:$0xf]
        %v599 = vld [vmem:[#allocation8 + $0x34] sm:$0xf]
        %v600 = vld [vmem:[#allocation8 + $0x38] sm:$0xf]
        %v601 = vld [vmem:[#allocation8 + $0x3c] sm:$0xf]
        %v602 = vld [vmem:[%s6] sm:$0x1]
        %v604 = vlaneseq
        %v605 = vshrl.u32 %v604, 7
        %v606 = vsub.s32 0, %v605
        %v607 = vrot.slane %v602, %v606
        %v625 = vunpack.c.l.b16 %v586
        %v626 = vunpack.c.l.b16 %v587
        %v627 = vunpack.c.l.b16 %v588
        %v628 = vunpack.c.l.b16 %v589
        %v629 = vunpack.c.l.b16 %v590
        %v630 = vunpack.c.l.b16 %v591
        %v631 = vunpack.c.l.b16 %v592
        %v632 = vunpack.c.l.b16 %v593
        %v633 = vunpack.c.l.b16 %v594
        %v634 = vunpack.c.l.b16 %v595
        %v635 = vunpack.c.l.b16 %v596
        %v636 = vunpack.c.l.b16 %v597
        %v637 = vunpack.c.l.b16 %v598
        %v638 = vunpack.c.l.b16 %v599
        %v639 = vunpack.c.l.b16 %v600
        %v640 = vunpack.c.l.b16 %v601
        %v641 = vpack.c.b16 %v626, %v625
        %v642 = vpack.c.b16 %v628, %v627
        %v643 = vpack.c.b16 %v630, %v629
        %v644 = vpack.c.b16 %v632, %v631
        %v645 = vpack.c.b16 %v634, %v633
        %v646 = vpack.c.b16 %v636, %v635
        %v647 = vpack.c.b16 %v638, %v637
        %v648 = vpack.c.b16 %v640, %v639
        %657 = vmatprep.subr.bf16.mxu0 0
        %658 = vmatpush1.bf16.msra.mxu0 %v641
        %659 = vmatprep.subr.bf16.mxu0 0
        %660 = vmatpush1.bf16.msra.mxu0 %v642
        %661 = vmatprep.subr.bf16.mxu0 0
        %662 = vmatpush1.bf16.msra.mxu0 %v643
        %663 = vmatprep.subr.bf16.mxu0 0
        %664 = vmatpush1.bf16.msra.mxu0 %v644
        %665 = vmatprep.subr.bf16.mxu0 0
        %666 = vmatpush1.bf16.msra.mxu0 %v645
        %667 = vmatprep.subr.bf16.mxu0 0
        %668 = vmatpush1.bf16.msra.mxu0 %v646
        %669 = vmatprep.subr.bf16.mxu0 0
        %670 = vmatpush1.bf16.msra.mxu0 %v647
        %671 = vmatprep.subr.bf16.mxu0 0
        %672 = vmatpush1.bf16.msra.mxu0 %v648
        %673 = vmatprep.subr.bf16.mxu0 0
        %674 = vmatpush1.bf16.msra.mxu0 0
        %675 = vmatprep.subr.bf16.mxu0 0
        %676 = vmatpush1.bf16.msra.mxu0 0
        %677 = vmatprep.subr.bf16.mxu0 0
        %678 = vmatpush1.bf16.msra.mxu0 0
        %679 = vmatprep.subr.bf16.mxu0 0
        %680 = vmatpush1.bf16.msra.mxu0 0
        %681 = vmatprep.subr.bf16.mxu0 0
        %682 = vmatpush1.bf16.msra.mxu0 0
        %683 = vmatprep.subr.bf16.mxu0 0
        %684 = vmatpush1.bf16.msra.mxu0 0
        %685 = vmatprep.subr.bf16.mxu0 0
        %686 = vmatpush1.bf16.msra.mxu0 0
        %687 = vmatprep.subr.bf16.mxu0 0
        %688 = vmatpush1.bf16.msra.mxu0 0
        %689 = vmatprep.mubr.bf16.mxu0 0
        %690 = vmatmul.mubr.bf16.gmra.mrb[0].mxu0 %v585
        %v691 = vpop.f32.mrb[0].mxu0
        %v692 = vadd.f32 %v607, %v691
        %v693 = vpop.f32.mrb[0].mxu0
        %v694 = vpop.f32.mrb[0].mxu0
        %v695 = vpop.f32.mrb[0].mxu0
        %696 = vdwg.mxu0
        %v697 = vmul.f32 %v692, %v692
        %698 = vadd.xlane.f32.xlu0 %v697
        %v699 = vpop.xlane.xlu0 %698
        %v700 = vmax.f32 %v699, 1e-24
        %v701 = vrsqrt.pop %v700
        %v702 = vmul.f32 %v692, %v701
        %703 = vst [vmem:[%s337] sm:$0xff] %v702
        %s704 = sand.u32 %s186, 1
        %s705 = scalar_lea.sflag [#allocation4], %s704
        %s706 = sand.u32 %s186, 1
        %s707 = smul.addr %s706, 8
        %s708 = scalar_lea.vmem [#allocation10], %s707
        // Predicated region
        $region65: #{tpu_custom_call.1} parent=47 // pred_check
          %p709 = pneg %p196
        $region66: #{tpu_custom_call.1} parent=47 // pred_check_branch
          %711 = sbr.rel (%p709) target = $region68
        $region67: #{tpu_custom_call.1} parent=47 // pred_region
          %s713 = ssub.s32 128, 128
          %714 = vsyncadd %s705, %s713
          %s715 = smul.addr %s26, 128
          %s716 = scalar_lea.hbm %s7, %s715
          %s718 = sshll.u32 %s708, 4
          %s719 = int_to_ptr.vmem [resolvable:$true] %s718
          %721 = dma.vmem_to_hbm [thread:$0]  %s719, 128, %s716, %s705
        $region68: #{tpu_custom_call.1} parent=47 // pred_fallthru
          _
      $region48: #{tpu_custom_call.1} parent=5 // pred_fallthru
        _
      %p722 = scmp.le.s32.totalorder 2, %s21
      // Predicated region
      $region69: #{tpu_custom_call.1} parent=5 // pred_check
        %p723 = pneg %p722
      $region70: #{tpu_custom_call.1} parent=5 // pred_check_branch
        %725 = sbr.rel (%p723) target = $region72
      $region71: #{tpu_custom_call.1} parent=5 // pred_region
        %s726 = ssub.s32 %s21, 2
        // Predicated region
        $region73: #{tpu_custom_call.1} parent=71 // pred_check
          %p727 = pneg %p202
        $region74: #{tpu_custom_call.1} parent=71 // pred_check_branch
          %729 = sbr.rel (%p727) target = $region76
        $region75: #{tpu_custom_call.1} parent=71 // pred_region
          %s730 = sand.u32 %s187, 1
          %s731 = scalar_lea.sflag [#allocation4], %s730
          %s732 = sand.u32 %s187, 1
          %s733 = smul.addr %s732, 8
          %s734 = scalar_lea.vmem [#allocation10], %s733
          %735 = dma.done %s731, 128
        $region76: #{tpu_custom_call.1} parent=71 // pred_fallthru
          _
      $region72: #{tpu_custom_call.1} parent=5 // pred_fallthru
        _
    $region6: #{tpu_custom_call.1} parent=1 // loop_footer
      %s25 = sadd.s32 1, %s21
    $region7: #{tpu_custom_call.1} parent=1 // loop_footer_branch
      %20 = sbr.rel target = $region3
    $region8: #{tpu_custom_call.1} parent=1 // loop_exit
      _
    %736 = vsyncpa [#allocation3], 1
    %s737 = scalar_lea.sflag [#allocation3], 1
    %738 = vsyncpa %s737, 1
    %739 = vsyncpa [#allocation6], 1
    %740 = vsyncpa [#allocation9], 1
    %741 = vsyncpa [#allocation4], 1
    %s742 = scalar_lea.sflag [#allocation4], 1
    %743 = vsyncpa %s742, 1

</llo_original>
